<compile_context>
chip_gen: v6e
topology: v6e:2x2x1
jax: 0.10.0
libtpu: 0.0.40
codegen_flags: <defaults>
</compile_context>

<pallas_src>
import functools
import math

import jax
import jax.numpy as jnp
from jax.experimental import pallas as pl
from jax.experimental.pallas import tpu as pltpu


_TRANSCENDENTAL_ACTS = frozenset(
    {"sigmoid", "sigm", "sig", "swish", "swi", "tanh", "tan", "gelu", "ge"})


def _apply_activation(g: jax.Array, activation_type: str) -> jax.Array:
    """Gate activation, computed in f32 inside the kernel."""
    if activation_type in ("sigmoid", "sigm", "sig"):
        return jax.nn.sigmoid(g)
    if activation_type in ("relu", "re"):
        return jnp.maximum(g, 0.0)
    if activation_type in ("swish", "swi"):
        return g * jax.nn.sigmoid(g)
    if activation_type in ("tanh", "tan"):
        return jnp.tanh(g)
    if activation_type in ("gelu", "ge"):
        # Tanh approximation — matches the reference module's gelu() exactly.
        alpha = math.sqrt(2.0 / math.pi)
        return 0.5 * g * (1.0 + jnp.tanh(alpha * (g + 0.044715 * g * g * g)))
    # Identity (matches get_activation's fallback).
    return g


def _glu_kernel(x_ref, w_ref, b_ref, o_ref, acc_ref, *, activation_type: str):
    """One grid step of the fused dual-Linear GLU.

    x_ref:   (tm, tk)      input tile
    w_ref:   (tk, 2*tn)    [Wg | Wp] tile-interleaved weight tile
    b_ref:   (1, 2*tn)     [bg | bp] tile-interleaved bias tile
    o_ref:   (tm, tn)      output tile
    acc_ref: (tm, 2*tn)    f32 accumulator (gate half | projection half)
    """
    k = pl.program_id(2)

    contrib = jnp.dot(x_ref[...], w_ref[...],
                      preferred_element_type=jnp.float32)

    @pl.when(k == 0)
    def _():
        # Init by assignment: saves the zero-fill + read-modify-write pass.
        acc_ref[...] = contrib

    @pl.when(k > 0)
    def _():
        acc_ref[...] += contrib

    @pl.when(k == pl.num_programs(2) - 1)
    def _():
        tn = o_ref.shape[-1]
        z = acc_ref[...] + b_ref[...].astype(jnp.float32)
        g = z[:, :tn]          # gate half of this N-tile
        p = z[:, tn:]          # projection half of this N-tile
        o_ref[...] = (_apply_activation(g, activation_type) * p).astype(o_ref.dtype)


def _round_up(x: int, m: int) -> int:
    return ((x + m - 1) // m) * m


def _choose_tile(dim: int, candidates) -> int:
    """Pick a tile for `dim`.

    Preference order:
      1. largest candidate that divides `dim` exactly (no padding),
      2. if `dim` is no bigger than the largest candidate: one full-extent
         block (always a legal TPU block shape),
      3. otherwise (large ragged dim): the largest candidate whose padding
         overhead is <= ~12.5%, falling back to the smallest candidate.
    The caller pads the array up to a multiple of the returned tile.
    """
    for t in candidates:
        if t <= dim and dim % t == 0:
            return t
    if dim <= candidates[0]:
        return dim
    for t in candidates:
        if t <= dim and _round_up(dim, t) - dim <= max(dim // 8, 1):
            return t
    return candidates[-1]


def glu_pallas(x: jax.Array,
               wg: jax.Array, bg: jax.Array,
               wp: jax.Array, bp: jax.Array,
               *, activation_type: str = "sigmoid") -> jax.Array:
    """Fused GLU: act(x @ wg + bg) * (x @ wp + bp).

    x:  [..., K]   (arbitrary leading dims)
    wg: [K, N], bg: [N]   -- gate Linear (PyTorch weight transposed to [K, N])
    wp: [K, N], bp: [N]   -- projection Linear (same layout)
    returns [..., N] in x.dtype.

    Weights MUST be supplied as [K, N]; they are never transposed inside the
    kernel (K maps to sublanes, N to lanes — exactly the MXU rhs layout).
    """
    orig_shape = x.shape
    K = int(orig_shape[-1])
    N = int(wg.shape[1])
    M = int(math.prod(orig_shape[:-1]))

    x_isz = jnp.dtype(x.dtype).itemsize
    w_isz = jnp.dtype(wg.dtype).itemsize
    o_isz = x_isz

    # ---------------- tile selection ----------------------------------------
    # dtype-aware sublane floor for the M tile (bf16 packs 16 rows per vreg).
    if x_isz >= 4:
        min_tm = 8
    elif x_isz == 2:
        min_tm = 16
    else:
        min_tm = 32
    tm_cands = tuple(t for t in (1024, 512, 256, 128, 64, 32, 16, 8) if t >= min_tm)
    tn_cands = (512, 256, 128)
    tk_cands = (512, 256, 128)

    tm = _choose_tile(M, tm_cands)
    tn = _choose_tile(N, tn_cands)
    tk = _choose_tile(K, tk_cands)

    # ---------------- VMEM budget --------------------------------------------
    # Budget the double-buffered pipeline for <=40 MiB so it fits v7x's
    # 64 MiB per-TC VMEM with ~25% headroom (v5e/v6e have 128 MiB physical).
    vmem_budget = 40 * 1024 * 1024

    def footprint(tm_, tn_, tk_):
        return (2 * tm_ * tk_ * x_isz            # x block, double buffered
                + 2 * tk_ * 2 * tn_ * w_isz      # [Wg|Wp] block
                + 2 * 2 * tn_ * w_isz            # [bg|bp] block
                + 2 * tm_ * tn_ * o_isz          # output block
                + tm_ * 2 * tn_ * 4)             # f32 accumulator

    while footprint(tm, tn, tk) > vmem_budget:
        if tk % 256 == 0:                        # halved tk stays 128-aligned
            tk //= 2
        elif tm % (2 * min_tm) == 0 and tm // 2 >= min_tm:
            tm //= 2
        elif tn % 256 == 0:
            tn //= 2
        else:
            break

    # ---------------- megacore (v7x: 2 TensorCores per chip) ----------------
    # Make sure the "parallel" grid axes give at least 2 tiles when legal.
    if _round_up(M, tm) // tm == 1 and _round_up(N, tn) // tn == 1:
        half = tm // 2
        if tm % 2 == 0 and half >= min_tm and half % min_tm == 0:
            tm = half

    M_pad = _round_up(M, tm)
    N_pad = _round_up(N, tn)
    K_pad = _round_up(K, tk)

    # ---------------- padding (exact: zero-pad K, slice off M/N padding) ----
    x2d = jnp.reshape(x, (M, K))
    if (M_pad, K_pad) != (M, K):
        x2d = jnp.pad(x2d, ((0, M_pad - M), (0, K_pad - K)))

    def _pad_weight(w):
        if (K_pad, N_pad) != (K, N):
            return jnp.pad(w, ((0, K_pad - K), (0, N_pad - N)))
        return w

    def _pad_bias(b):
        if N_pad != N:
            return jnp.pad(b, (0, N_pad - N))
        return b

    wg_p, wp_p = _pad_weight(wg), _pad_weight(wp)
    bg_p, bp_p = _pad_bias(bg), _pad_bias(bp)

    # Tile-interleaved [Wg | Wp]: for every N-tile j the gate tile and the
    # projection tile sit side by side, so each k-step is a single
    # (tm,tk)x(tk,2tn) MXU dot into one f32 accumulator.  In a real deployment
    # this packing is done once at parameter-setup time, not per forward call.
    nj = N_pad // tn
    w_cat = jnp.concatenate(
        [wg_p.reshape(K_pad, nj, 1, tn), wp_p.reshape(K_pad, nj, 1, tn)],
        axis=2).reshape(K_pad, 2 * N_pad)
    b_cat = jnp.concatenate(
        [bg_p.reshape(nj, 1, tn), bp_p.reshape(nj, 1, tn)],
        axis=1).reshape(1, 2 * N_pad)

    grid = (M_pad // tm, N_pad // tn, K_pad // tk)

    # ---------------- scheduling hints ---------------------------------------
    flops = 4 * M * N * K + 3 * M * N
    transcendentals = M * N if activation_type in _TRANSCENDENTAL_ACTS else 0
    bytes_accessed = (M * K * x_isz + 2 * K * N * w_isz
                      + 2 * N * jnp.dtype(bg.dtype).itemsize + M * N * o_isz)
    vmem_limit = int(min(48 * 1024 * 1024,
                         max(32 * 1024 * 1024, int(footprint(tm, tn, tk) * 1.5))))

    kernel = functools.partial(_glu_kernel, activation_type=activation_type)

    out2d = pl.pallas_call(
        kernel,
        out_shape=jax.ShapeDtypeStruct((M_pad, N_pad), x.dtype),
        grid_spec=pltpu.PrefetchScalarGridSpec(
            num_scalar_prefetch=0,
            grid=grid,
            in_specs=[
                pl.BlockSpec((tm, tk), lambda i, j, k: (i, k)),       # x
                pl.BlockSpec((tk, 2 * tn), lambda i, j, k: (k, j)),   # [Wg|Wp]
                pl.BlockSpec((1, 2 * tn), lambda i, j, k: (0, j)),    # [bg|bp]
            ],
            out_specs=pl.BlockSpec((tm, tn), lambda i, j, k: (i, j)),
            scratch_shapes=[
                pltpu.VMEM((tm, 2 * tn), jnp.float32),  # fused accumulator
            ],
        ),
        compiler_params=pltpu.CompilerParams(
            dimension_semantics=("parallel", "parallel", "arbitrary"),
            vmem_limit_bytes=vmem_limit,
        ),
        cost_estimate=pl.CostEstimate(
            flops=flops,
            transcendentals=transcendentals,
            bytes_accessed=bytes_accessed,
        ),
    )(x2d, w_cat, b_cat)

    if (M_pad, N_pad) != (M, N):
        out2d = out2d[:M, :N]
    return jnp.reshape(out2d, orig_shape[:-1] + (N,))


def _reference_glu(x, wg, bg, wp, bp, activation_type):
    """Pure-JAX reference: act(x @ wg + bg) * (x @ wp + bp)."""
    return _apply_activation(x @ wg + bg, activation_type) * (x @ wp + bp)


if __name__ == "__main__":
    key = jax.random.PRNGKey(0)
    k_params1, k_params2, k_x1, k_x2 = jax.random.split(key, 4)

    def make_params(k, in_f, out_f, dtype):
        k_wg, k_bg, k_wp, k_bp = jax.random.split(k, 4)
        scale = 1.0 / math.sqrt(in_f)
        wg = jax.random.uniform(k_wg, (in_f, out_f), minval=-scale, maxval=scale, dtype=dtype)
        bg = jax.random.uniform(k_bg, (out_f,), minval=-scale, maxval=scale, dtype=dtype)
        wp = jax.random.uniform(k_wp, (in_f, out_f), minval=-scale, maxval=scale, dtype=dtype)
        bp = jax.random.uniform(k_bp, (out_f,), minval=-scale, maxval=scale, dtype=dtype)
        return wg, bg, wp, bp

    # --- Test 1: small shapes consistent with the module -------------------
    # batch=2, seq=8, hidden=32; sigmoid gate == get_activation('glu').
    batch, seq, in_features, out_features = 2, 8, 32, 32
    x1 = jax.random.normal(k_x1, (batch, seq, in_features), dtype=jnp.float32)
    params1 = make_params(k_params1, in_features, out_features, jnp.float32)

    out1 = jax.block_until_ready(glu_pallas(x1, *params1, activation_type="sigmoid"))
    ref1 = _reference_glu(x1, *params1, "sigmoid")
    assert out1.shape == ref1.shape and out1.dtype == x1.dtype
    assert jnp.allclose(out1, ref1, atol=1e-5, rtol=1e-5), \
        float(jnp.max(jnp.abs(out1 - ref1)))

    # --- Test 2: ragged K exercises zero-padding + multi-step K reduction ---
    in_features2, out_features2 = 600, 32
    x2 = jax.random.normal(k_x2, (batch, seq, in_features2), dtype=jnp.float32)
    params2 = make_params(k_params2, in_features2, out_features2, jnp.float32)

    out2 = jax.block_until_ready(glu_pallas(x2, *params2, activation_type="swish"))
    ref2 = _reference_glu(x2, *params2, "swish")
    assert out2.shape == ref2.shape and out2.dtype == x2.dtype
    assert jnp.allclose(out2, ref2, atol=1e-4, rtol=1e-4), \
        float(jnp.max(jnp.abs(out2 - ref2)))

    print("KERNEL_OK")
</pallas_src>

<mosaic_0001>
module attributes {stable_mosaic.version = 11 : i64} {
  func.func @_glu_kernel(%arg0: i32, %arg1: i32, %arg2: i32, %arg3: memref<8x32xf32, #tpu.memory_space<vmem>>, %arg4: memref<32x64xf32, #tpu.memory_space<vmem>>, %arg5: memref<1x64xf32, #tpu.memory_space<vmem>>, %arg6: memref<8x32xf32, #tpu.memory_space<vmem>>, %arg7: memref<8x64xf32, #tpu.memory_space<vmem>>) attributes {dimension_semantics = [#tpu.dimension_semantics<parallel>, #tpu.dimension_semantics<parallel>, #tpu.dimension_semantics<arbitrary>], iteration_bounds = array<i64: 2, 1, 1>, scalar_prefetch = 0 : i64, scratch_operands = 1 : i64, tpu.core_type = #tpu.core_type<tc>, window_params = [{transform_indices = @transform_0, window_bounds = array<i64: 8, 32>}, {transform_indices = @transform_1, window_bounds = array<i64: 32, 64>}, {transform_indices = @transform_2, window_bounds = array<i64: 1, 64>}, {transform_indices = @transform_3, window_bounds = array<i64: 8, 32>}]} {
    %c0 = arith.constant 0 : index
    %c0_0 = arith.constant 0 : index
    %0 = vector.load %arg3[%c0, %c0_0] : memref<8x32xf32, #tpu.memory_space<vmem>>, vector<8x32xf32>
    %c0_1 = arith.constant 0 : index
    %c0_2 = arith.constant 0 : index
    %1 = vector.load %arg4[%c0_1, %c0_2] : memref<32x64xf32, #tpu.memory_space<vmem>>, vector<32x64xf32>
    %cst = arith.constant dense<0.000000e+00> : vector<8x64xf32>
    %2 = tpu.matmul %0, %1, %cst {dimension_numbers = #tpu.dot_dimension_numbers<[1], [0], [0], [1], [0, 0, 1, 1], [], []>} : vector<8x32xf32>, vector<32x64xf32>, vector<8x64xf32> -> vector<8x64xf32>
    %c0_i32 = arith.constant 0 : i32
    %3 = arith.cmpi eq, %arg2, %c0_i32 : i32
    %4 = arith.extui %3 : i1 to i32
    %c0_i32_3 = arith.constant 0 : i32
    %5 = arith.cmpi ne, %4, %c0_i32_3 : i32
    scf.if %5 {
      %c0_8 = arith.constant 0 : index
      %c0_9 = arith.constant 0 : index
      %12 = vector.load %arg7[%c0_8, %c0_9] : memref<8x64xf32, #tpu.memory_space<vmem>>, vector<8x64xf32>
      tpu.vector_store %arg7[%c0_8, %c0_9], %2 {strides = array<i32>} : memref<8x64xf32, #tpu.memory_space<vmem>>, vector<8x64xf32>,
    } else {
    }
    %c0_i32_4 = arith.constant 0 : i32
    %6 = arith.cmpi sgt, %arg2, %c0_i32_4 : i32
    %7 = arith.extui %6 : i1 to i32
    %c0_i32_5 = arith.constant 0 : i32
    %8 = arith.cmpi ne, %7, %c0_i32_5 : i32
    scf.if %8 {
      %c0_8 = arith.constant 0 : index
      %c0_9 = arith.constant 0 : index
      %12 = vector.load %arg7[%c0_8, %c0_9] : memref<8x64xf32, #tpu.memory_space<vmem>>, vector<8x64xf32>
      %13 = arith.addf %12, %2 : vector<8x64xf32>
      %c0_10 = arith.constant 0 : index
      %c0_11 = arith.constant 0 : index
      %14 = vector.load %arg7[%c0_10, %c0_11] : memref<8x64xf32, #tpu.memory_space<vmem>>, vector<8x64xf32>
      tpu.vector_store %arg7[%c0_10, %c0_11], %13 {strides = array<i32>} : memref<8x64xf32, #tpu.memory_space<vmem>>, vector<8x64xf32>,
    } else {
    }
    %c0_i32_6 = arith.constant 0 : i32
    %9 = arith.cmpi eq, %arg2, %c0_i32_6 : i32
    %10 = arith.extui %9 : i1 to i32
    %c0_i32_7 = arith.constant 0 : i32
    %11 = arith.cmpi ne, %10, %c0_i32_7 : i32
    scf.if %11 {
      %c0_8 = arith.constant 0 : index
      %c0_9 = arith.constant 0 : index
      %12 = vector.load %arg7[%c0_8, %c0_9] : memref<8x64xf32, #tpu.memory_space<vmem>>, vector<8x64xf32>
      %c0_10 = arith.constant 0 : index
      %c0_11 = arith.constant 0 : index
      %13 = vector.load %arg5[%c0_10, %c0_11] : memref<1x64xf32, #tpu.memory_space<vmem>>, vector<1x64xf32>
      %14 = vector.broadcast %13 : vector<1x64xf32> to vector<8x64xf32>
      %15 = arith.addf %12, %14 : vector<8x64xf32>
      %16 = vector.extract_strided_slice %15 {offsets = [0, 0], sizes = [8, 32], strides = [1, 1]} : vector<8x64xf32> to vector<8x32xf32>
      %17 = vector.extract_strided_slice %15 {offsets = [0, 32], sizes = [8, 32], strides = [1, 1]} : vector<8x64xf32> to vector<8x32xf32>
      %18 = arith.negf %16 : vector<8x32xf32>
      %19 = math.exp %18 : vector<8x32xf32>
      %cst_12 = arith.constant 1.000000e+00 : f32
      %20 = vector.broadcast %cst_12 : f32 to vector<8x32xf32>
      %21 = arith.addf %20, %19 : vector<8x32xf32>
      %22 = arith.divf %20, %21 : vector<8x32xf32>
      %23 = arith.mulf %22, %17 : vector<8x32xf32>
      %c0_13 = arith.constant 0 : index
      %c0_14 = arith.constant 0 : index
      %24 = vector.load %arg6[%c0_13, %c0_14] : memref<8x32xf32, #tpu.memory_space<vmem>>, vector<8x32xf32>
      tpu.vector_store %arg6[%c0_13, %c0_14], %23 {strides = array<i32>} : memref<8x32xf32, #tpu.memory_space<vmem>>, vector<8x32xf32>,
    } else {
    }
    return
  }
  func.func @transform_0(%arg0: i32, %arg1: i32, %arg2: i32) -> (i32, i32) {
    %c0_i32 = arith.constant 0 : i32
    return %arg0, %arg2 : i32, i32
  }
  func.func @transform_1(%arg0: i32, %arg1: i32, %arg2: i32) -> (i32, i32) {
    %c0_i32 = arith.constant 0 : i32
    return %arg2, %arg1 : i32, i32
  }
  func.func @transform_2(%arg0: i32, %arg1: i32, %arg2: i32) -> (i32, i32) {
    %c0_i32 = arith.constant 0 : i32
    %c0_i32_0 = arith.constant 0 : i32
    return %c0_i32, %arg1 : i32, i32
  }
  func.func @transform_3(%arg0: i32, %arg1: i32, %arg2: i32) -> (i32, i32) {
    %c0_i32 = arith.constant 0 : i32
    return %arg0, %arg1 : i32, i32
  }
}

</mosaic_0001>

<llo_original>
// kernel: tpu_custom_call.1
$region0: #{tpu_custom_call.1}
  #allocation0 [shape = 'u32[]', space=smem, size = 0x4, offset = 0x4, fixed_abs, tag = 'smem constant byte address 0x4 - core index']
  #allocation1 [shape = 'u32[144,128]{1,0:T(1,128)}', space=vmem, size = 0x12000, scoped, tag = 'internal scratch']
  #allocation2 [shape = 'f32[8,64]{1,0:T(8,128)}', space=vmem, size = 0x1000, scoped, tag = 'scratch operand']
  %s0 = inlined_call_operand.hbm [shape: f32[16,32], index: 0, kind: input, shape index: {}]
  %s1 = inlined_call_operand.hbm [shape: f32[32,64], index: 1, kind: input, shape index: {}]
  %s2 = inlined_call_operand.vmem [shape: f32[1,64], index: 2, kind: input, shape index: {}]
  %s3 = inlined_call_operand.hbm [shape: f32[16,32], index: 3, kind: output, shape index: {}]
  %s4 = sld [smem:[#allocation0]]
  $region65: #{tpu_custom_call.1} parent=0
    _
  %s6 = ssub.s32 1, %s4
  %s7 = scalar_select 0, %s6, %s4
  $region1: #{tpu_custom_call.1} parent=0
    #allocation3 [shape = 'u8[8192]{0}', space=vmem, size = 0x2000, scoped, tag = 'input window, operand 0']
    #allocation4 [shape = 's32[2]{0}', space=sflag, size = 0x8, scoped, tag = 'scoped memory for tpu_custom_call.1']
    #allocation5 [shape = 's32[2]{0}', space=sflag, size = 0x8, scoped, tag = 'scoped memory for tpu_custom_call.1']
    #allocation6 [shape = 'u8[16384]{0}', space=vmem, size = 0x4000, scoped, tag = 'input window, operand 1, single buffered']
    #allocation7 [shape = 's32[1]{0}', space=sflag, size = 0x4, scoped, tag = 'scoped memory for tpu_custom_call.1']
    #allocation8 [shape = 'u8[8192]{0}', space=vmem, size = 0x2000, scoped, tag = 'output window, operand 0']
    %8 = vsyncpa [#allocation4], 0
    %s9 = scalar_lea.sflag [#allocation4], 1
    %10 = vsyncpa %s9, 0
    %11 = vsyncpa [#allocation7], 0
    %12 = vsyncpa [#allocation5], 0
    %s13 = scalar_lea.sflag [#allocation5], 1
    %14 = vsyncpa %s13, 0
    loop: start=0, step=1, limit=4
    $region2: #{tpu_custom_call.1} parent=1 // loop_pre_header
      _
    $region3: #{tpu_custom_call.1} parent=1 // loop_header
      %s16 = sphi 0, %s20
      %p17 = scmp.ge.s32.totalorder %s16, 4
      %s23 = sphi 0, %s42
      %s24 = sphi 0, %s38
      %s25 = sphi 0, %s34
      %s26 = sphi 0, %s23
      %s27 = sphi 0, %s24
      %s28 = sphi 0, %s25
      %s29 = sphi 0, %s26
      %s30 = sphi 0, %s27
      %s31 = sphi 0, %s28
      %s47 = sphi 0, %s49
      %s50 = sphi 0, %s47
      %s51 = sphi 0, %s50
      %s67 = sphi 0, %s51
      %s75 = sphi 0, %s77
      %s78 = sphi 0, %s75
      %s79 = sphi 0, %s78
      %s95 = sphi 0, %s79
      %s101 = sphi 0, %s103
      %s104 = sphi 0, %s101
      %s105 = sphi 0, %s104
      %s121 = sphi 0, %s105
      %s129 = sphi 0, %s131
      %s132 = sphi 0, %s129
      %s133 = sphi 0, %s132
      %s149 = sphi 0, %s133
    $region4: #{tpu_custom_call.1} parent=1 // loop_header_branch
      %19 = sbr.rel (%p17) target = $region8
    $region5: #{tpu_custom_call.1} parent=1 // loop_body
      %s21 = ssub.s32 %s16, 1
      %s22 = ssub.s32 %s16, 2
      %s32 = sadd.s32 1, %s25
      %p33 = scmp.ge.s32.totalorder %s32, 1
      %s34 = scalar_select %p33, 0, %s32
      %s35 = sadd.s32 1, %s24
      %s36 = scalar_select %p33, %s35, %s24
      %p37 = scmp.ge.s32.totalorder %s36, 1
      %s38 = scalar_select %p37, 0, %s36
      %s39 = sadd.s32 1, %s23
      %s40 = scalar_select %p37, %s39, %s23
      %p41 = scmp.ge.s32.totalorder %s40, 2
      %s42 = scalar_select %p41, 0, %s40
      %s43 = ssub.s32 %s23, %s42
      %s44 = ssub.s32 %s25, %s34
      %s45 = sor.u32 %s43, %s44
      %p46 = scmp.eq.s32.totalorder %s45, 0
      %s48 = sadd.s32 %s47, 1
      %s49 = scalar_select %p46, %s47, %s48
      %p52 = pneg %p46
      %p53 = scmp.eq.s32.totalorder %s16, 1
      %p54 = por %p52, %p53
      %p55 = scmp.ne.s32.totalorder %s47, %s50
      %p56 = scmp.eq.s32.totalorder %s16, 0
      %p57 = por %p55, %p56
      %p58 = scmp.ne.s32.totalorder %s47, %s50
      %p59 = scmp.eq.s32.totalorder %s21, 1
      %p60 = por %p58, %p59
      %p61 = scmp.ne.s32.totalorder %s50, %s51
      %p62 = scmp.eq.s32.totalorder %s21, 0
      %p63 = por %p61, %p62
      %p64 = scmp.ne.s32.totalorder %s50, %s51
      %p65 = scmp.eq.s32.totalorder %s22, 1
      %p66 = por %p64, %p65
      %p68 = scmp.ne.s32.totalorder %s51, %s67
      %p69 = scmp.eq.s32.totalorder %s22, 0
      %p70 = por %p68, %p69
      %s71 = ssub.s32 %s25, %s34
      %s72 = ssub.s32 %s24, %s38
      %s73 = sor.u32 %s71, %s72
      %p74 = scmp.eq.s32.totalorder %s73, 0
      %s76 = sadd.s32 %s75, 1
      %s77 = scalar_select %p74, %s75, %s76
      %p80 = pneg %p74
      %p81 = scmp.eq.s32.totalorder %s16, 1
      %p82 = por %p80, %p81
      %p83 = scmp.ne.s32.totalorder %s75, %s78
      %p84 = scmp.eq.s32.totalorder %s16, 0
      %p85 = por %p83, %p84
      %p86 = scmp.ne.s32.totalorder %s75, %s78
      %p87 = scmp.eq.s32.totalorder %s21, 1
      %p88 = por %p86, %p87
      %p89 = scmp.ne.s32.totalorder %s78, %s79
      %p90 = scmp.eq.s32.totalorder %s21, 0
      %p91 = por %p89, %p90
      %p92 = scmp.ne.s32.totalorder %s78, %s79
      %p93 = scmp.eq.s32.totalorder %s22, 1
      %p94 = por %p92, %p93
      %p96 = scmp.ne.s32.totalorder %s79, %s95
      %p97 = scmp.eq.s32.totalorder %s22, 0
      %p98 = por %p96, %p97
      %s99 = ssub.s32 %s24, %s38
      %p100 = scmp.eq.s32.totalorder %s99, 0
      %s102 = sadd.s32 %s101, 1
      %s103 = scalar_select %p100, %s101, %s102
      %p106 = pneg %p100
      %p107 = scmp.eq.s32.totalorder %s16, 1
      %p108 = por %p106, %p107
      %p109 = scmp.ne.s32.totalorder %s101, %s104
      %p110 = scmp.eq.s32.totalorder %s16, 0
      %p111 = por %p109, %p110
      %p112 = scmp.ne.s32.totalorder %s101, %s104
      %p113 = scmp.eq.s32.totalorder %s21, 1
      %p114 = por %p112, %p113
      %p115 = scmp.ne.s32.totalorder %s104, %s105
      %p116 = scmp.eq.s32.totalorder %s21, 0
      %p117 = por %p115, %p116
      %p118 = scmp.ne.s32.totalorder %s104, %s105
      %p119 = scmp.eq.s32.totalorder %s22, 1
      %p120 = por %p118, %p119
      %p122 = scmp.ne.s32.totalorder %s105, %s121
      %p123 = scmp.eq.s32.totalorder %s22, 0
      %p124 = por %p122, %p123
      %s125 = ssub.s32 %s23, %s42
      %s126 = ssub.s32 %s24, %s38
      %s127 = sor.u32 %s125, %s126
      %p128 = scmp.eq.s32.totalorder %s127, 0
      %s130 = sadd.s32 %s129, 1
      %s131 = scalar_select %p128, %s129, %s130
      %p134 = pneg %p128
      %p135 = scmp.eq.s32.totalorder %s16, 1
      %p136 = por %p134, %p135
      %p137 = scmp.ne.s32.totalorder %s129, %s132
      %p138 = scmp.eq.s32.totalorder %s16, 0
      %p139 = por %p137, %p138
      %p140 = scmp.ne.s32.totalorder %s129, %s132
      %p141 = scmp.eq.s32.totalorder %s21, 1
      %p142 = por %p140, %p141
      %p143 = scmp.ne.s32.totalorder %s132, %s133
      %p144 = scmp.eq.s32.totalorder %s21, 0
      %p145 = por %p143, %p144
      %p146 = scmp.ne.s32.totalorder %s132, %s133
      %p147 = scmp.eq.s32.totalorder %s22, 1
      %p148 = por %p146, %p147
      %p150 = scmp.ne.s32.totalorder %s133, %s149
      %p151 = scmp.eq.s32.totalorder %s22, 0
      %p152 = por %p150, %p151
      %p153 = scmp.le.s32.totalorder 1, %s16
      %p154 = scmp.lt.s32.totalorder %s16, 3
      %p155 = pnand %p153, %p154
      %p156 = pneg %p155
      // Predicated region
      $region9: #{tpu_custom_call.1} parent=5 // pred_check
        _
      $region10: #{tpu_custom_call.1} parent=5 // pred_check_branch
        %158 = sbr.rel (%p155) target = $region12
      $region11: #{tpu_custom_call.1} parent=5 // pred_region
        %s159 = ssub.s32 %s16, 1
        // Predicated region
        $region13: #{tpu_custom_call.1} parent=11 // pred_check
          %p160 = pneg %p91
        $region14: #{tpu_custom_call.1} parent=11 // pred_check_branch
          %162 = sbr.rel (%p160) target = $region16
        $region15: #{tpu_custom_call.1} parent=11 // pred_region
          %s163 = smul.u32 4, %s28
          %s165 = ssub.s32 512, 512
          %166 = vsyncadd [#allocation7], %s165
          %s167 = sadd.s32 %s27, %s163
          %s168 = smul.addr %s167, 128
          %s169 = scalar_lea.hbm %s1, %s168
          %s170 = sshll.u32 [#allocation6], 4
          %s171 = int_to_ptr.vmem [resolvable:$true] %s170
          %176 = dma.hbm_to_vmem [thread:$0]  %s169, 512, %s171, [#allocation7], 128, 128, 8
        $region16: #{tpu_custom_call.1} parent=11 // pred_fallthru
          _
        // Predicated region
        $region17: #{tpu_custom_call.1} parent=11 // pred_check
          %p177 = pneg %p117
        $region18: #{tpu_custom_call.1} parent=11 // pred_check_branch
          %179 = sbr.rel (%p177) target = $region20
        $region19: #{tpu_custom_call.1} parent=11 // pred_region
          %p180 = scmp.lt.s32.totalorder %s27, 0
          %s181 = scalar_select %p180, %s27, 0
          %s182 = scalar_lea.vmem %s2, %s181
        $region20: #{tpu_custom_call.1} parent=11 // pred_fallthru
          _
      $region12: #{tpu_custom_call.1} parent=5 // pred_fallthru
        _
      %p183 = scmp.lt.s32.totalorder %s16, 2
      // Predicated region
      $region21: #{tpu_custom_call.1} parent=5 // pred_check
        %p184 = pneg %p183
      $region22: #{tpu_custom_call.1} parent=5 // pred_check_branch
        %186 = sbr.rel (%p184) target = $region24
      $region23: #{tpu_custom_call.1} parent=5 // pred_region
        // Predicated region
        $region25: #{tpu_custom_call.1} parent=23 // pred_check
          %p187 = pneg %p57
        $region26: #{tpu_custom_call.1} parent=23 // pred_check_branch
          %189 = sbr.rel (%p187) target = $region28
        $region27: #{tpu_custom_call.1} parent=23 // pred_region
          %s190 = sand.u32 %s47, 1
          %s191 = scalar_lea.sflag [#allocation4], %s190
          %s192 = sand.u32 %s47, 1
          %s193 = smul.addr %s192, 8
          %s194 = scalar_lea.vmem [#allocation3], %s193
          %s196 = ssub.s32 128, 128
          %197 = vsyncadd %s191, %s196
          %s198 = sadd.s32 %s25, %s23
          %s199 = smul.addr %s198, 128
          %s200 = scalar_lea.hbm %s0, %s199
          %s202 = sshll.u32 %s194, 4
          %s203 = int_to_ptr.vmem [resolvable:$true] %s202
          %205 = dma.hbm_to_vmem [thread:$0]  %s200, 128, %s203, %s191
        $region28: #{tpu_custom_call.1} parent=23 // pred_fallthru
          _
      $region24: #{tpu_custom_call.1} parent=5 // pred_fallthru
        _
      %p206 = scmp.le.s32.totalorder 1, %s16
      %p207 = scmp.lt.s32.totalorder %s16, 3
      %p208 = pnand %p206, %p207
      %p209 = pneg %p208
      // Predicated region
      $region29: #{tpu_custom_call.1} parent=5 // pred_check
        _
      $region30: #{tpu_custom_call.1} parent=5 // pred_check_branch
        %211 = sbr.rel (%p208) target = $region32
      $region31: #{tpu_custom_call.1} parent=5 // pred_region
        %s212 = ssub.s32 %s16, 1
        %s213 = sand.u32 %s50, 1
        %s214 = scalar_lea.sflag [#allocation4], %s213
        %s215 = sand.u32 %s50, 1
        %s216 = smul.addr %s215, 8
        %s217 = scalar_lea.vmem [#allocation3], %s216
        // Predicated region
        $region33: #{tpu_custom_call.1} parent=31 // pred_check
          %p218 = pneg %p63
        $region34: #{tpu_custom_call.1} parent=31 // pred_check_branch
          %220 = sbr.rel (%p218) target = $region36
        $region35: #{tpu_custom_call.1} parent=31 // pred_region
          %221 = dma.done %s214, 128
        $region36: #{tpu_custom_call.1} parent=31 // pred_fallthru
          _
        // Predicated region
        $region37: #{tpu_custom_call.1} parent=31 // pred_check
          %p222 = pneg %p91
        $region38: #{tpu_custom_call.1} parent=31 // pred_check_branch
          %224 = sbr.rel (%p222) target = $region40
        $region39: #{tpu_custom_call.1} parent=31 // pred_region
          %225 = dma.done [#allocation7], 512
        $region40: #{tpu_custom_call.1} parent=31 // pred_fallthru
          _
        %s226 = sand.u32 %s50, 1
        %s227 = scalar_lea.sflag [#allocation4], %s226
        %s228 = sand.u32 %s50, 1
        %s229 = smul.addr %s228, 8
        %s230 = scalar_lea.vmem [#allocation3], %s229
        %p231 = pneg %p63
        %p232 = pneg %p60
        %p233 = pneg %p91
        %p234 = pneg %p88
        %p235 = scmp.lt.s32.totalorder %s27, 0
        %s236 = scalar_select %p235, %s27, 0
        %s237 = scalar_lea.vmem %s2, %s236
        %p238 = pneg %p117
        %p239 = pneg %p114
        %p240 = pneg %p145
        %p241 = pneg %p142
        %s242 = sand.u32 %s132, 1
        %s243 = scalar_lea.sflag [#allocation5], %s242
        %s244 = sand.u32 %s132, 1
        %s245 = smul.addr %s244, 8
        %s246 = scalar_lea.vmem [#allocation8], %s245
        %s247 = smul.u32 4, %s28
        %p248 = scmp.lt.s32.totalorder %s27, 0
        %s249 = scalar_select %p248, %s27, 0
        %s250 = scalar_lea.vmem %s2, %s249
        %v251 = vld [vmem:[%s217] sm:$0xff]
        %v252 = vld [vmem:[#allocation6] sm:$0xff]
        %v253 = vld [vmem:[#allocation6 + $0x8] sm:$0xff]
        %v254 = vld [vmem:[#allocation6 + $0x10] sm:$0xff]
        %v255 = vld [vmem:[#allocation6 + $0x18] sm:$0xff]
        %vm256 = vcmask 261120
        %v258 = vsel %vm256, %v251, 0
        %260 = vmatprep.subr.mxu0 0.0
        %261 = vmatpush1.msra.mxu0 0.0
        %262 = vmatprep.subr.mxu0 0.0
        %263 = vmatpush1.msra.mxu0 0.0
        %264 = vmatprep.subr.mxu0 0.0
        %265 = vmatpush1.msra.mxu0 0.0
        %266 = vmatprep.subr.mxu0 0.0
        %267 = vmatpush1.msra.mxu0 0.0
        %268 = vmatprep.subr.mxu0 0.0
        %269 = vmatpush1.msra.mxu0 0.0
        %270 = vmatprep.subr.mxu0 0.0
        %271 = vmatpush1.msra.mxu0 0.0
        %272 = vmatprep.subr.mxu0 0.0
        %273 = vmatpush1.msra.mxu0 0.0
        %274 = vmatprep.subr.mxu0 0.0
        %275 = vmatpush1.msra.mxu0 0.0
        %276 = vmatprep.subr.mxu0 0.0
        %277 = vmatpush1.msra.mxu0 0.0
        %278 = vmatprep.subr.mxu0 0.0
        %279 = vmatpush1.msra.mxu0 0.0
        %280 = vmatprep.subr.mxu0 0.0
        %281 = vmatpush1.msra.mxu0 0.0
        %282 = vmatprep.subr.mxu0 0.0
        %283 = vmatpush1.msra.mxu0 0.0
        %284 = vmatprep.subr.mxu0 0.0
        %285 = vmatpush1.msra.mxu0 %v255
        %286 = vmatprep.subr.mxu0 0.0
        %287 = vmatpush1.msra.mxu0 %v254
        %288 = vmatprep.subr.mxu0 0.0
        %289 = vmatpush1.msra.mxu0 %v253
        %290 = vmatprep.subr.mxu0 0.0
        %291 = vmatpush1.msra.mxu0 %v252
        %292 = vmatprep.subr.mxu0 0.0
        %293 = vmatpush2.msra.mxu0 0.0
        %294 = vmatprep.subr.mxu0 0.0
        %295 = vmatpush2.msra.mxu0 0.0
        %296 = vmatprep.subr.mxu0 0.0
        %297 = vmatpush2.msra.mxu0 0.0
        %298 = vmatprep.subr.mxu0 0.0
        %299 = vmatpush2.msra.mxu0 0.0
        %300 = vmatprep.subr.mxu0 0.0
        %301 = vmatpush2.msra.mxu0 0.0
        %302 = vmatprep.subr.mxu0 0.0
        %303 = vmatpush2.msra.mxu0 0.0
        %304 = vmatprep.subr.mxu0 0.0
        %305 = vmatpush2.msra.mxu0 0.0
        %306 = vmatprep.subr.mxu0 0.0
        %307 = vmatpush2.msra.mxu0 0.0
        %308 = vmatprep.subr.mxu0 0.0
        %309 = vmatpush2.msra.mxu0 0.0
        %310 = vmatprep.subr.mxu0 0.0
        %311 = vmatpush2.msra.mxu0 0.0
        %312 = vmatprep.subr.mxu0 0.0
        %313 = vmatpush2.msra.mxu0 0.0
        %314 = vmatprep.subr.mxu0 0.0
        %315 = vmatpush2.msra.mxu0 0.0
        %316 = vmatprep.subr.mxu0 0.0
        %317 = vmatpush2.msra.mxu0 0.0
        %318 = vmatprep.subr.mxu0 0.0
        %319 = vmatpush2.msra.mxu0 0.0
        %320 = vmatprep.subr.mxu0 0.0
        %321 = vmatpush2.msra.mxu0 0.0
        %322 = vmatprep.subr.mxu0 0.0
        %323 = vmatpush2.msra.mxu0 0.0
        %324 = vmatprep.mubr.f32.mxu0 0.0
        %325 = vmatmul.mubr.f32.gmra.mxu0 %v258
        %v326 = vpop.f32.mrf.mxu0
        %v327 = vadd.f32 0.0, %v326
        %v328 = vpop.f32.mrf.mxu0
        %329 = vdwg.mxu0
        %p330 = scmp.eq.s32.totalorder %s28, 0
        // Predicated region
        $region41: #{tpu_custom_call.1} parent=31 // pred_check
          %p331 = pneg %p330
        $region42: #{tpu_custom_call.1} parent=31 // pred_check_branch
          %333 = sbr.rel (%p331) target = $region44
        $region43: #{tpu_custom_call.1} parent=31 // pred_region
          %vm334 = vcmask 523264
          %335 = vst.msk [vmem:[#allocation2] sm:$0xff] %vm334, %v327
        $region44: #{tpu_custom_call.1} parent=31 // pred_fallthru
          _
        %p336 = scmp.gt.s32.totalorder %s28, 0
        // Predicated region
        $region45: #{tpu_custom_call.1} parent=31 // pred_check
          %p337 = pneg %p336
        $region46: #{tpu_custom_call.1} parent=31 // pred_check_branch
          %339 = sbr.rel (%p337) target = $region48
        $region47: #{tpu_custom_call.1} parent=31 // pred_region
          %v340 = vld [vmem:[#allocation2] sm:$0xff]
          %v341 = vadd.f32 %v340, %v327
          %vm342 = vcmask 523264
          %343 = vst.msk [vmem:[#allocation2] sm:$0xff] %vm342, %v341
        $region48: #{tpu_custom_call.1} parent=31 // pred_fallthru
          _
        // Predicated region
        $region49: #{tpu_custom_call.1} parent=31 // pred_check
          %p344 = pneg %p330
        $region50: #{tpu_custom_call.1} parent=31 // pred_check_branch
          %346 = sbr.rel (%p344) target = $region52
        $region51: #{tpu_custom_call.1} parent=31 // pred_region
          %v347 = vld [vmem:[#allocation2] sm:$0xff]
          %v348 = vld [vmem:[%s250] sm:$0x1]
          %v350 = vlaneseq
          %v351 = vshrl.u32 %v350, 7
          %v352 = vsub.s32 0, %v351
          %v353 = vrot.slane %v348, %v352
          %v355 = vadd.f32 %v347, %v353
          %v356 = vxor.u32 %v355, 2147483648
          %v357 = vmul.f32 %v356, 1.442695
          %v358 = vpow.pop %v357
          %v359 = vadd.f32 %v358, 1.0
          %v360 = vrcp.pop %v359
          %v361 = vmul.f32 1.0, %v360
          %363 = vrot.lane.b32.xlu0 %v355, 96
          %v364 = vpop.permute.xlu0 %363
          %v366 = vmul.f32 %v361, %v364
          %367 = vst.msk [vmem:[%s246] sm:$0xff] %vm256, %v366
        $region52: #{tpu_custom_call.1} parent=31 // pred_fallthru
          _
        %s368 = sand.u32 %s132, 1
        %s369 = scalar_lea.sflag [#allocation5], %s368
        %s370 = sand.u32 %s132, 1
        %s371 = smul.addr %s370, 8
        %s372 = scalar_lea.vmem [#allocation8], %s371
        // Predicated region
        $region53: #{tpu_custom_call.1} parent=31 // pred_check
          %p373 = pneg %p142
        $region54: #{tpu_custom_call.1} parent=31 // pred_check_branch
          %375 = sbr.rel (%p373) target = $region56
        $region55: #{tpu_custom_call.1} parent=31 // pred_region
          %s377 = ssub.s32 128, 128
          %378 = vsyncadd %s369, %s377
          %s379 = sadd.s32 %s27, %s26
          %s380 = smul.addr %s379, 128
          %s381 = scalar_lea.hbm %s3, %s380
          %s383 = sshll.u32 %s372, 4
          %s384 = int_to_ptr.vmem [resolvable:$true] %s383
          %386 = dma.vmem_to_hbm [thread:$0]  %s384, 128, %s381, %s369
        $region56: #{tpu_custom_call.1} parent=31 // pred_fallthru
          _
      $region32: #{tpu_custom_call.1} parent=5 // pred_fallthru
        _
      %p387 = scmp.le.s32.totalorder 2, %s16
      // Predicated region
      $region57: #{tpu_custom_call.1} parent=5 // pred_check
        %p388 = pneg %p387
      $region58: #{tpu_custom_call.1} parent=5 // pred_check_branch
        %390 = sbr.rel (%p388) target = $region60
      $region59: #{tpu_custom_call.1} parent=5 // pred_region
        %s391 = ssub.s32 %s16, 2
        // Predicated region
        $region61: #{tpu_custom_call.1} parent=59 // pred_check
          %p392 = pneg %p148
        $region62: #{tpu_custom_call.1} parent=59 // pred_check_branch
          %394 = sbr.rel (%p392) target = $region64
        $region63: #{tpu_custom_call.1} parent=59 // pred_region
          %s395 = sand.u32 %s133, 1
          %s396 = scalar_lea.sflag [#allocation5], %s395
          %s397 = sand.u32 %s133, 1
          %s398 = smul.addr %s397, 8
          %s399 = scalar_lea.vmem [#allocation8], %s398
          %400 = dma.done %s396, 128
        $region64: #{tpu_custom_call.1} parent=59 // pred_fallthru
          _
      $region60: #{tpu_custom_call.1} parent=5 // pred_fallthru
        _
    $region6: #{tpu_custom_call.1} parent=1 // loop_footer
      %s20 = sadd.s32 1, %s16
    $region7: #{tpu_custom_call.1} parent=1 // loop_footer_branch
      %15 = sbr.rel target = $region3
    $region8: #{tpu_custom_call.1} parent=1 // loop_exit
      _
    %401 = vsyncpa [#allocation4], 1
    %s402 = scalar_lea.sflag [#allocation4], 1
    %403 = vsyncpa %s402, 1
    %404 = vsyncpa [#allocation7], 1
    %405 = vsyncpa [#allocation5], 1
    %s406 = scalar_lea.sflag [#allocation5], 1
    %407 = vsyncpa %s406, 1

</llo_original>
